<compile_context>
chip_gen: v6e
topology: v6e:2x2x1
jax: 0.10.0
libtpu: 0.0.40
codegen_flags: <defaults>
</compile_context>

<pallas_src>
import functools

import jax
import jax.numpy as jnp
from jax.experimental import pallas as pl
from jax.experimental.pallas import tpu as pltpu


_SMALL_FALLBACK_BYTES = 6 * 1024 * 1024   # below ~6 MiB of HBM traffic, XLA fusion wins
_TARGET_BLOCK_BYTES = 2 * 1024 * 1024     # ~2 MiB per buffer block: roofline saturates here
_VMEM_BUDGET_CAP = 32 * 1024 * 1024       # double-buffered working-set cap (v7x-safe)
_MIN_GRID_STEPS = 8                       # >= 4 steps per TensorCore on v7x (2 TCs)
_LANE_WIDTHS = (4096, 2048, 1024, 512, 256, 128)  # preferred lane-dense view widths


def _additive_fusion_kernel(*refs):
    """refs = (in_ref_0, ..., in_ref_{n-1}, out_ref). Elementwise sum on the VPU.

    Accumulates in float32 when the output is a low-precision float dtype so that
    many-modality sums do not lose precision (free filler under the DMA bound).
    """
    *in_refs, out_ref = refs
    out_dtype = out_ref.dtype
    if jnp.issubdtype(out_dtype, jnp.floating):
        acc_dtype = jnp.promote_types(out_dtype, jnp.float32)
    else:
        # Integer inputs accumulate in the input dtype and can overflow exactly as the
        # reference would.
        acc_dtype = out_dtype
    acc = in_refs[0][...].astype(acc_dtype)
    for r in in_refs[1:]:
        acc = acc + r[...].astype(acc_dtype)
    out_ref[...] = acc.astype(out_dtype)


def _canonical_view(B, D):
    """Pick a lane-dense 2D view (rows, lanes) for the elementwise sum.

    Elementwise sum is reshape-invariant and the arrays are contiguous, so this is free
    layout plumbing. Returns (B, D) unchanged when no lane-dense view exists or the
    original shape is already well-formed.
    """
    if D % 128 == 0 and 512 <= D <= 4096:
        return B, D                       # already lane-dense and reasonably wide
    N = B * D
    if N % 128 != 0:
        return B, D                       # cannot be lane-dense without padding
    for L in _LANE_WIDTHS:
        if N % L == 0:
            return N // L, L
    return B, D


def _pick_bm(B, dn, itemsize, sublane, per_buf_bytes, min_row_steps):
    """Row-tile size: capped by the per-buffer byte budget, with enough grid steps for
    pipeline overlap / megacore balance, preferring tiles that divide B evenly."""
    bm = (per_buf_bytes // max(1, dn * itemsize)) // sublane * sublane
    bm = max(sublane, bm)
    if bm > B:
        bm = B
    # Enforce a minimum number of row steps so the BlockSpec pipeline actually overlaps
    # prefetch/writeback and both v7x TensorCores get a stream of work.
    if min_row_steps > 1:
        cap = -(-B // min_row_steps)
        cap = max(sublane, ((cap + sublane - 1) // sublane) * sublane)
        bm = min(bm, cap)
    if bm >= B:
        return B
    # Prefer a sublane-aligned bm near the target that (a) divides B (no ragged masked
    # tail) and (b) gives an even step count (balanced across the two v7x TCs).
    lo = max(sublane, (bm // 2) // sublane * sublane)
    best_bm, best_key = bm, (-1, -1)
    cand, tried = bm, 0
    while cand >= lo and tried < 128:
        steps = -(-B // cand)
        score = (2 if B % cand == 0 else 0) + (1 if steps % 2 == 0 else 0)
        key = (score, cand)
        if key > best_key:
            best_key, best_bm = key, cand
        cand -= sublane
        tried += 1
    return best_bm


def _tile_sizes(B, D, n_in, itemsize):
    """Pick (bm, dn, vmem_limit_bytes) for the (B, D) elementwise-sum kernel."""
    # Physical VMEM per TensorCore: 128 MiB on v5e/v6e, 64 MiB on v7x. If the query
    # fails, assume the smallest generation (64 MiB) — never over-commit on v7x.
    try:
        vmem_phys = int(pltpu.get_tpu_info().vmem_capacity_bytes)
    except Exception:
        vmem_phys = 64 * 1024 * 1024

    n_bufs = 2 * (n_in + 1)               # double-buffered inputs + output
    vmem_budget = min(vmem_phys // 2, _VMEM_BUDGET_CAP)
    per_buf = min(_TARGET_BLOCK_BYTES, max(1, vmem_budget // n_bufs))

    # Dtype-aware packed sublane multiple: f32 -> 8, bf16/f16 -> 16, int8/fp8 -> 32.
    sublane = {4: 8, 2: 16, 1: 32}.get(itemsize, 8)

    # Lane (latent) tiling is effectively never needed after the canonical-view reshape;
    # keep a defensive lane-dense cap for very wide, un-reshaped inputs.
    dn = D if (D % 128 != 0 or D <= 4096) else 4096

    d_steps = -(-D // dn)
    min_row_steps = max(1, -(-_MIN_GRID_STEPS // d_steps))
    bm = _pick_bm(B, dn, itemsize, sublane, per_buf, min_row_steps)

    footprint = n_bufs * bm * dn * itemsize
    vmem_limit = min(max(32 * 1024 * 1024, footprint + 8 * 1024 * 1024),
                     max(32 * 1024 * 1024, vmem_phys // 2))
    return bm, dn, vmem_limit


def additive_fusion(embeddings, *, force_pallas: bool = False):
    """Sum a list of same-shape (B, latent_size) embeddings (AdditiveFusion.forward).

    Returns None when the batch dimension is 0, mirroring the PyTorch module.
    """
    if embeddings[0].shape[0] == 0:
        return None

    B, D = embeddings[0].shape            # (batch, latent_size)
    n_in = len(embeddings)
    out_dtype = jnp.result_type(*embeddings)
    itemsize = jnp.dtype(out_dtype).itemsize
    total_bytes = (n_in + 1) * B * D * itemsize

    if n_in == 1:
        return embeddings[0].astype(out_dtype)

    if not force_pallas and total_bytes < _SMALL_FALLBACK_BYTES:
        # Tiny inputs: pallas_call dispatch + pipeline warmup dominates; XLA fuses the
        # adds into a single VPU pass at roofline anyway.
        return functools.reduce(jnp.add, embeddings).astype(out_dtype)

    # Lane-dense canonical view (free: contiguous reshape, elementwise-sum invariant).
    R, L = _canonical_view(B, D)
    views = embeddings if (R, L) == (B, D) else [e.reshape(R, L) for e in embeddings]

    bm, dn, vmem_limit = _tile_sizes(R, L, n_in, itemsize)
    grid = (pl.cdiv(R, bm), pl.cdiv(L, dn))
    spec = pl.BlockSpec((bm, dn), lambda i, j: (i, j))
    # TODO(synk): optionally sweep pipeline_mode=pl.Buffered(3) on the input specs
    #             (small <5% win expected; re-check the v7x VMEM budget first).

    cost = pl.CostEstimate(
        flops=(n_in - 1) * B * D,
        transcendentals=0,
        bytes_accessed=total_bytes,
    )

    out = pl.pallas_call(
        _additive_fusion_kernel,
        out_shape=jax.ShapeDtypeStruct((R, L), out_dtype),
        grid_spec=pltpu.PrefetchScalarGridSpec(
            num_scalar_prefetch=0,
            grid=grid,
            in_specs=[spec] * n_in,
            out_specs=spec,
        ),
        compiler_params=pltpu.CompilerParams(
            dimension_semantics=("parallel", "parallel"),
            vmem_limit_bytes=vmem_limit,
        ),
        cost_estimate=cost,
    )(*views)

    return out if (R, L) == (B, D) else out.reshape(B, D)


if __name__ == "__main__":
    key = jax.random.PRNGKey(0)
    n_modalities = 3

    # 1) Small example shape consistent with the module (batch=8, latent_size=128):
    #    force the Pallas path (exercises the lane-dense reshape + single-step grid).
    B, D = 8, 128
    keys = jax.random.split(key, n_modalities)
    embeddings = [jax.random.normal(k, (B, D), dtype=jnp.float32) for k in keys]
    out = jax.block_until_ready(additive_fusion(embeddings, force_pallas=True))
    ref = functools.reduce(jnp.add, embeddings)
    assert out.shape == (B, D)
    assert jnp.allclose(out, ref, atol=1e-5), "f32 mismatch vs reference sum"

    # 2) Moderate shape: reshaped lane-dense view + multi-step parallel grid.
    B2, D2 = 640, 256
    keys2 = jax.random.split(jax.random.PRNGKey(1), n_modalities)
    emb2 = [jax.random.normal(k, (B2, D2), dtype=jnp.float32) for k in keys2]
    out2 = jax.block_until_ready(additive_fusion(emb2, force_pallas=True))
    ref2 = functools.reduce(jnp.add, emb2)
    assert jnp.allclose(out2, ref2, atol=1e-5), "f32 (tiled) mismatch"

    # 3) bf16 with a batch that is not a multiple of the tile: validates f32 in-kernel
    #    accumulation + ragged last block on the reshaped view.
    B3, D3 = 300, 128
    keys3 = jax.random.split(jax.random.PRNGKey(2), n_modalities)
    emb3 = [jax.random.normal(k, (B3, D3), dtype=jnp.float32).astype(jnp.bfloat16)
            for k in keys3]
    out3 = jax.block_until_ready(additive_fusion(emb3, force_pallas=True))
    ref3 = sum(e.astype(jnp.float32) for e in emb3).astype(jnp.bfloat16)
    assert jnp.allclose(out3.astype(jnp.float32), ref3.astype(jnp.float32),
                        atol=2e-2, rtol=2e-2), "bf16 mismatch"

    # 4) Latent dim not a multiple of 128 but B*D is: canonical-view reshape path.
    B4, D4 = 64, 96
    keys4 = jax.random.split(jax.random.PRNGKey(3), n_modalities)
    emb4 = [jax.random.normal(k, (B4, D4), dtype=jnp.float32) for k in keys4]
    out4 = jax.block_until_ready(additive_fusion(emb4, force_pallas=True))
    ref4 = functools.reduce(jnp.add, emb4)
    assert out4.shape == (B4, D4)
    assert jnp.allclose(out4, ref4, atol=1e-5), "reshape-path mismatch"

    # 5) Small-shape fallback (plain XLA fusion) and empty-batch behaviour.
    out_fb = jax.block_until_ready(additive_fusion(embeddings))
    assert jnp.allclose(out_fb, ref, atol=1e-5)
    empty = [jnp.zeros((0, D), jnp.float32) for _ in range(n_modalities)]
    assert additive_fusion(empty) is None

    print("KERNEL_OK")
</pallas_src>

<mosaic_0001>
module attributes {stable_mosaic.version = 11 : i64} {
  func.func @_additive_fusion_kernel(%arg0: i32, %arg1: i32, %arg2: memref<1x1024xf32, #tpu.memory_space<vmem>>, %arg3: memref<1x1024xf32, #tpu.memory_space<vmem>>, %arg4: memref<1x1024xf32, #tpu.memory_space<vmem>>, %arg5: memref<1x1024xf32, #tpu.memory_space<vmem>>) attributes {dimension_semantics = [#tpu.dimension_semantics<parallel>, #tpu.dimension_semantics<parallel>], iteration_bounds = array<i64: 1, 1>, scalar_prefetch = 0 : i64, scratch_operands = 0 : i64, tpu.core_type = #tpu.core_type<tc>, window_params = [{transform_indices = @transform_0, window_bounds = array<i64: 1, 1024>}, {transform_indices = @transform_1, window_bounds = array<i64: 1, 1024>}, {transform_indices = @transform_2, window_bounds = array<i64: 1, 1024>}, {transform_indices = @transform_3, window_bounds = array<i64: 1, 1024>}]} {
    %c0 = arith.constant 0 : index
    %c0_0 = arith.constant 0 : index
    %0 = vector.load %arg2[%c0, %c0_0] : memref<1x1024xf32, #tpu.memory_space<vmem>>, vector<1x1024xf32>
    %c0_1 = arith.constant 0 : index
    %c0_2 = arith.constant 0 : index
    %1 = vector.load %arg3[%c0_1, %c0_2] : memref<1x1024xf32, #tpu.memory_space<vmem>>, vector<1x1024xf32>
    %2 = arith.addf %0, %1 : vector<1x1024xf32>
    %c0_3 = arith.constant 0 : index
    %c0_4 = arith.constant 0 : index
    %3 = vector.load %arg4[%c0_3, %c0_4] : memref<1x1024xf32, #tpu.memory_space<vmem>>, vector<1x1024xf32>
    %4 = arith.addf %2, %3 : vector<1x1024xf32>
    %c0_5 = arith.constant 0 : index
    %c0_6 = arith.constant 0 : index
    %5 = vector.load %arg5[%c0_5, %c0_6] : memref<1x1024xf32, #tpu.memory_space<vmem>>, vector<1x1024xf32>
    tpu.vector_store %arg5[%c0_5, %c0_6], %4 {strides = array<i32>} : memref<1x1024xf32, #tpu.memory_space<vmem>>, vector<1x1024xf32>,
    return
  }
  func.func @transform_0(%arg0: i32, %arg1: i32) -> (i32, i32) {
    %c0_i32 = arith.constant 0 : i32
    return %arg0, %arg1 : i32, i32
  }
  func.func @transform_1(%arg0: i32, %arg1: i32) -> (i32, i32) {
    %c0_i32 = arith.constant 0 : i32
    return %arg0, %arg1 : i32, i32
  }
  func.func @transform_2(%arg0: i32, %arg1: i32) -> (i32, i32) {
    %c0_i32 = arith.constant 0 : i32
    return %arg0, %arg1 : i32, i32
  }
  func.func @transform_3(%arg0: i32, %arg1: i32) -> (i32, i32) {
    %c0_i32 = arith.constant 0 : i32
    return %arg0, %arg1 : i32, i32
  }
}

</mosaic_0001>

<llo_original>
// kernel: tpu_custom_call.1
$region0: #{tpu_custom_call.1}
  #allocation0 [shape = 'u32[]', space=smem, size = 0x4, offset = 0x4, fixed_abs, tag = 'smem constant byte address 0x4 - core index']
  #allocation1 [shape = 'u32[144,128]{1,0:T(1,128)}', space=vmem, size = 0x12000, scoped, tag = 'internal scratch']
  %s0 = inlined_call_operand.hbm [shape: f32[1,1024], index: 0, kind: input, shape index: {}]
  %s1 = inlined_call_operand.hbm [shape: f32[1,1024], index: 1, kind: input, shape index: {}]
  %s2 = inlined_call_operand.hbm [shape: f32[1,1024], index: 2, kind: input, shape index: {}]
  %s3 = inlined_call_operand.hbm [shape: f32[1,1024], index: 3, kind: output, shape index: {}]
  %s4 = sld [smem:[#allocation0]]
  $region34: #{tpu_custom_call.1} parent=0
    _
  %s6 = ssub.s32 1, %s4
  %s7 = scalar_select 0, %s6, %s4
  $region1: #{tpu_custom_call.1} parent=0
    #allocation2 [shape = 'u8[4096]{0}', space=vmem, size = 0x1000, scoped, tag = 'input window, operand 0, single buffered']
    #allocation3 [shape = 's32[1]{0}', space=sflag, size = 0x4, scoped, tag = 'scoped memory for tpu_custom_call.1']
    #allocation4 [shape = 's32[1]{0}', space=sflag, size = 0x4, scoped, tag = 'scoped memory for tpu_custom_call.1']
    #allocation5 [shape = 'u8[4096]{0}', space=vmem, size = 0x1000, scoped, tag = 'input window, operand 1, single buffered']
    #allocation6 [shape = 's32[1]{0}', space=sflag, size = 0x4, scoped, tag = 'scoped memory for tpu_custom_call.1']
    #allocation7 [shape = 'u8[4096]{0}', space=vmem, size = 0x1000, scoped, tag = 'input window, operand 2, single buffered']
    #allocation8 [shape = 'u8[4096]{0}', space=vmem, size = 0x1000, scoped, tag = 'output window, operand 0, single buffered']
    %8 = vsyncpa [#allocation3], 0
    %9 = vsyncpa [#allocation6], 0
    %10 = vsyncpa [#allocation4], 0
    // Predicated region
    $region2: #{tpu_custom_call.1} parent=1 // pred_check
      _
    $region3: #{tpu_custom_call.1} parent=1 // pred_check_branch
      %12 = sbr.rel (0) target = $region5
    $region4: #{tpu_custom_call.1} parent=1 // pred_region
      %s14 = ssub.s32 128, 128
      %15 = vsyncadd [#allocation3], %s14
      %s17 = sshll.u32 [#allocation2], 4
      %s18 = int_to_ptr.vmem [resolvable:$true] %s17
      %20 = dma.hbm_to_vmem [thread:$0]  %s0, 128, %s18, [#allocation3]
    $region5: #{tpu_custom_call.1} parent=1 // pred_fallthru
      _
    // Predicated region
    $region6: #{tpu_custom_call.1} parent=1 // pred_check
      _
    $region7: #{tpu_custom_call.1} parent=1 // pred_check_branch
      %22 = sbr.rel (0) target = $region9
    $region8: #{tpu_custom_call.1} parent=1 // pred_region
      %s24 = ssub.s32 128, 128
      %25 = vsyncadd [#allocation6], %s24
      %s27 = sshll.u32 [#allocation5], 4
      %s28 = int_to_ptr.vmem [resolvable:$true] %s27
      %30 = dma.hbm_to_vmem [thread:$0]  %s1, 128, %s28, [#allocation6]
    $region9: #{tpu_custom_call.1} parent=1 // pred_fallthru
      _
    // Predicated region
    $region10: #{tpu_custom_call.1} parent=1 // pred_check
      _
    $region11: #{tpu_custom_call.1} parent=1 // pred_check_branch
      %32 = sbr.rel (0) target = $region13
    $region12: #{tpu_custom_call.1} parent=1 // pred_region
      %s34 = ssub.s32 128, 128
      %35 = vsyncadd [#allocation6], %s34
      %s37 = sshll.u32 [#allocation7], 4
      %s38 = int_to_ptr.vmem [resolvable:$true] %s37
      %40 = dma.hbm_to_vmem [thread:$0]  %s2, 128, %s38, [#allocation6]
    $region13: #{tpu_custom_call.1} parent=1 // pred_fallthru
      _
    // Predicated region
    $region14: #{tpu_custom_call.1} parent=1 // pred_check
      _
    $region15: #{tpu_custom_call.1} parent=1 // pred_check_branch
      %42 = sbr.rel (0) target = $region17
    $region16: #{tpu_custom_call.1} parent=1 // pred_region
      %43 = dma.done [#allocation3], 128
    $region17: #{tpu_custom_call.1} parent=1 // pred_fallthru
      _
    // Predicated region
    $region18: #{tpu_custom_call.1} parent=1 // pred_check
      _
    $region19: #{tpu_custom_call.1} parent=1 // pred_check_branch
      %45 = sbr.rel (0) target = $region21
    $region20: #{tpu_custom_call.1} parent=1 // pred_region
      %46 = dma.done [#allocation6], 128
    $region21: #{tpu_custom_call.1} parent=1 // pred_fallthru
      _
    // Predicated region
    $region22: #{tpu_custom_call.1} parent=1 // pred_check
      _
    $region23: #{tpu_custom_call.1} parent=1 // pred_check_branch
      %48 = sbr.rel (0) target = $region25
    $region24: #{tpu_custom_call.1} parent=1 // pred_region
      %49 = dma.done [#allocation6], 128
    $region25: #{tpu_custom_call.1} parent=1 // pred_fallthru
      _
    %v50 = vld [vmem:[#allocation2] sm:$0xff]
    %v51 = vld [vmem:[#allocation5] sm:$0xff]
    %v52 = vadd.f32 %v50, %v51
    %v53 = vld [vmem:[#allocation7] sm:$0xff]
    %v54 = vadd.f32 %v52, %v53
    %55 = vst [vmem:[#allocation8] sm:$0xff] %v54
    // Predicated region
    $region26: #{tpu_custom_call.1} parent=1 // pred_check
      _
    $region27: #{tpu_custom_call.1} parent=1 // pred_check_branch
      %57 = sbr.rel (0) target = $region29
    $region28: #{tpu_custom_call.1} parent=1 // pred_region
      %s59 = ssub.s32 128, 128
      %60 = vsyncadd [#allocation4], %s59
      %s62 = sshll.u32 [#allocation8], 4
      %s63 = int_to_ptr.vmem [resolvable:$true] %s62
      %65 = dma.vmem_to_hbm [thread:$0]  %s63, 128, %s3, [#allocation4]
    $region29: #{tpu_custom_call.1} parent=1 // pred_fallthru
      _
    // Predicated region
    $region30: #{tpu_custom_call.1} parent=1 // pred_check
      _
    $region31: #{tpu_custom_call.1} parent=1 // pred_check_branch
      %67 = sbr.rel (0) target = $region33
    $region32: #{tpu_custom_call.1} parent=1 // pred_region
      %68 = dma.done [#allocation4], 128
    $region33: #{tpu_custom_call.1} parent=1 // pred_fallthru
      _
    %69 = vsyncpa [#allocation3], 1
    %70 = vsyncpa [#allocation6], 1
    %71 = vsyncpa [#allocation4], 1

</llo_original>
